<compile_context>
chip_gen: v6e
topology: v6e:2x2x1
jax: 0.10.0
libtpu: 0.0.40
codegen_flags: <defaults>
</compile_context>

<pallas_src>
import functools

import jax
import jax.numpy as jnp
from jax.experimental import pallas as pl
from jax.experimental.pallas import tpu as pltpu


def _round_up(x, n):
    return ((x + n - 1) // n) * n


def _soft_argmax_kernel(beta_ref, h_ref, rowid_ref, coords_ref, out_ref, *,
                        n_row, n_col):
    # beta_ref:   (Mt, 1)   f32   per-row (= per-keypoint) inverse temperature
    # h_ref:      (Mt, HW)  f32   flattened heatmaps, Mt rows of the B*C slab
    # rowid_ref:  (1, HW)   i32   spatial row index i at flattened position p = i*W + j
    # coords_ref: (8, HW)   f32   rows = [x*size_mult, y*size_mult, 1, 0, 0, 0, 0, 0]
    # out_ref:    (2, Mt)   f32   row 0 = x_vals, row 1 = y_vals  (lane-dense output)
    eps = 1e-8
    hw = n_row * n_col

    row_id = rowid_ref[...]                                       # (1, HW) int32

    # Fold beta (>0) and the constant 7x7 divisor into one elementwise pre-scale.
    hb = h_ref[...] * (beta_ref[...] * (1.0 / 49.0))               # (Mt, HW)

    # --- masks for the separable 7x7 zero-padded average pool --------------------
    # Derived from the same roll primitive / shift as the data (tiny (1, HW) work),
    # so they are exact under either rotation-direction convention.
    col_terms = []   # +/- d neighbours along j: valid iff source lies in same row
    for d in (1, 2, 3):
        for s in (d, hw - d):
            src_row = pltpu.roll(row_id, s, 1)
            col_terms.append((s, (src_row == row_id).astype(jnp.float32)))
    row_terms = []   # +/- d neighbours along i: row differs by exactly d (no wrap, H>=7)
    for d in (1, 2, 3):
        for s in (d * n_col, hw - d * n_col):
            src_row = pltpu.roll(row_id, s, 1)
            diff = src_row - row_id
            row_terms.append((s, ((diff == d) | (diff == -d)).astype(jnp.float32)))

    # --- separable pooling: 12 full-tile lane rolls + multiply-accumulate --------
    col_pooled = hb                                                # d = 0 term
    for s, m in col_terms:
        col_pooled = col_pooled + pltpu.roll(hb, s, 1) * m
    pooled = col_pooled                                            # d = 0 term
    for s, m in row_terms:
        pooled = pooled + pltpu.roll(col_pooled, s, 1) * m

    # --- numerically stable softmax + expected coordinates -----------------------
    mx = jnp.max(pooled, axis=1, keepdims=True)                    # (Mt, 1)
    e = jnp.exp(pooled - mx)                                       # (Mt, HW)
    # (8, HW) x (Mt, HW) contracting last dims -> (8, Mt) on the MXU:
    # rows 0..2 = [sum e*x, sum e*y, sum e], rows 3..7 = 0.
    moments_t = jax.lax.dot_general(
        coords_ref[...], e,
        dimension_numbers=(((1,), (1,)), ((), ())),
        preferred_element_type=jnp.float32)                        # (8, Mt)
    inv = pl.reciprocal(moments_t[2:3, :] + eps)                   # exact (tolerance-safe)
    out_ref[...] = moments_t[0:2, :] * inv                         # (2, Mt) = (x; y)


def _vmem_capacity_bytes():
    try:
        return int(pltpu.get_tpu_info().vmem_capacity_bytes)
    except Exception:
        return 64 * 1024 * 1024       # conservative (v7x-class) fallback


def _pick_tiling(m_total, hw):
    """Choose (m_tile, m_pad, vmem_limit) per TPU generation."""
    vmem_cap = _vmem_capacity_bytes()
    two_cores = vmem_cap <= 64 * 1024 * 1024          # v7x-class: 64 MiB/TC, 2 TCs
    vmem_limit = (48 if two_cores else 64) * 1024 * 1024
    # Budget: ~8 live (m_tile, hw) f32 buffers (double-buffered input slab + pooling
    # temporaries + e).
    bytes_per_row = 8 * hw * 4
    cap = min(1024, max(128, (vmem_limit // bytes_per_row) // 128 * 128))
    m8 = _round_up(m_total, 8)
    n_core = 2 if two_cores else 1
    if m8 <= cap and (n_core == 1 or m8 <= 128):
        m_tile = m8                                    # single full-height block
    else:
        # multiple-of-128 tiles so the lane-dense output block stays legal; >= n_core
        # grid steps so both v7x TensorCores get work.
        want = _round_up(max(-(-m_total // n_core), 128), 128)
        m_tile = min(cap, want)
    m_pad = _round_up(m_total, m_tile)
    return m_tile, m_pad, vmem_limit


def soft_argmax_pavlo(heatmaps, beta, size_mult=1.0):
    """heatmaps: (B, C, H, W) float32 (NCHW).  beta: (C,) float32, beta > 0.
    Returns (B, C, 2) with last dim = (x_vals, y_vals)."""
    bch, n_kpts, n_row, n_col = heatmaps.shape
    hw = n_row * n_col
    # TODO(synk): n_row < 7 would need explicit wrap masks (or a dense-pool fallback).
    assert n_row >= 7, "roll-based separable pooling requires n_row >= 7"

    # --- flatten (B, C) into one MXU-friendly M dimension, pick tiling ----------
    m_total = bch * n_kpts
    m_tile, m_pad, vmem_limit = _pick_tiling(m_total, hw)

    h_flat = heatmaps.reshape(m_total, hw).astype(jnp.float32)       # row = b*C + c
    beta_flat = jnp.tile(beta.astype(jnp.float32), bch).reshape(m_total, 1)
    if m_pad != m_total:
        h_flat = jnp.pad(h_flat, ((0, m_pad - m_total), (0, 0)))
        beta_flat = jnp.pad(beta_flat, ((0, m_pad - m_total), (0, 0)),
                            constant_values=1.0)

    # --- small constant operands --------------------------------------------------
    row_ids = (jnp.arange(hw, dtype=jnp.int32) // n_col).reshape(1, hw)
    cols = jnp.tile(jnp.arange(n_col, dtype=jnp.float32), n_row)      # x at p = i*W + j
    rows = jnp.repeat(jnp.arange(n_row, dtype=jnp.float32), n_col)    # y at p
    coords_t = jnp.zeros((8, hw), jnp.float32)                        # 8 rows: MXU-friendly
    coords_t = coords_t.at[0].set(cols * float(size_mult))
    coords_t = coords_t.at[1].set(rows * float(size_mult))
    coords_t = coords_t.at[2].set(1.0)

    grid = (m_pad // m_tile,)
    out = pl.pallas_call(
        functools.partial(_soft_argmax_kernel, n_row=n_row, n_col=n_col),
        out_shape=jax.ShapeDtypeStruct((2, m_pad), jnp.float32),
        grid_spec=pltpu.PrefetchScalarGridSpec(
            num_scalar_prefetch=0,
            grid=grid,
            in_specs=[
                pl.BlockSpec((m_tile, 1), lambda i: (i, 0)),      # beta
                pl.BlockSpec((m_tile, hw), lambda i: (i, 0)),     # heatmap slab
                pl.BlockSpec((1, hw), lambda i: (0, 0)),          # spatial row ids
                pl.BlockSpec((8, hw), lambda i: (0, 0)),          # [x, y, 1, 0..] rows
            ],
            out_specs=pl.BlockSpec((2, m_tile), lambda i: (0, i)),
        ),
        compiler_params=pltpu.CompilerParams(
            dimension_semantics=("parallel",),
            vmem_limit_bytes=vmem_limit,
        ),
    )(beta_flat, h_flat, row_ids, coords_t)

    # (2, m_pad) lane-dense result -> (B, C, 2)
    return out[:, :m_total].T.reshape(bch, n_kpts, 2)


def _reference(heatmaps, beta, size_mult=1.0):
    """Pure-JAX reference mirroring the PyTorch forward (for verification)."""
    bch, n_kpts, n_row, n_col = heatmaps.shape
    eps = 1e-8
    pooled = jax.lax.reduce_window(
        heatmaps, 0.0, jax.lax.add,
        window_dimensions=(1, 1, 7, 7),
        window_strides=(1, 1, 1, 1),
        padding=[(0, 0), (0, 0), (3, 3), (3, 3)],
    ) / 49.0
    flat = pooled.reshape(bch, n_kpts, -1)
    flat = flat - jnp.max(flat, axis=2, keepdims=True)
    e = jnp.exp(beta.reshape(1, n_kpts, 1) * flat)
    norm = (e / (jnp.sum(e, axis=2, keepdims=True) + eps)).reshape(
        bch, n_kpts, n_row, n_col)
    col_idx = (jnp.arange(n_col, dtype=jnp.float32) * size_mult)[None, None, None, :]
    row_idx = (jnp.arange(n_row, dtype=jnp.float32) * size_mult)[None, None, :, None]
    x_vals = jnp.sum(norm * col_idx, axis=(2, 3))
    y_vals = jnp.sum(norm * row_idx, axis=(2, 3))
    return jnp.stack([x_vals, y_vals], axis=2)


if __name__ == "__main__":
    key = jax.random.PRNGKey(0)
    batch, n_kpts, n_row, n_col = 2, 4, 16, 16
    heatmaps = jax.random.normal(key, (batch, n_kpts, n_row, n_col), dtype=jnp.float32)

    # Deterministic parameter init (learned_beta=False path: ones * initial_beta).
    initial_beta = 25.0
    beta = jnp.ones((n_kpts,), dtype=jnp.float32) * initial_beta

    out = soft_argmax_pavlo(heatmaps, beta, size_mult=1.0)
    out = jax.block_until_ready(out)

    ref = jax.block_until_ready(_reference(heatmaps, beta, size_mult=1.0))
    assert out.shape == (batch, n_kpts, 2)
    assert jnp.allclose(out, ref, rtol=1e-4, atol=1e-4), (out, ref)

    print("KERNEL_OK")
</pallas_src>

<mosaic_0001>
module attributes {stable_mosaic.version = 11 : i64} {
  func.func @_soft_argmax_kernel(%arg0: i32, %arg1: memref<8x1xf32, #tpu.memory_space<vmem>>, %arg2: memref<8x256xf32, #tpu.memory_space<vmem>>, %arg3: memref<1x256xi32, #tpu.memory_space<vmem>>, %arg4: memref<8x256xf32, #tpu.memory_space<vmem>>, %arg5: memref<2x8xf32, #tpu.memory_space<vmem>>) attributes {dimension_semantics = [#tpu.dimension_semantics<parallel>], iteration_bounds = array<i64: 1>, scalar_prefetch = 0 : i64, scratch_operands = 0 : i64, tpu.core_type = #tpu.core_type<tc>, window_params = [{transform_indices = @transform_0, window_bounds = array<i64: 8, 1>}, {transform_indices = @transform_1, window_bounds = array<i64: 8, 256>}, {pipeline_mode = #tpu.pipeline_mode<synchronous>, transform_indices = @transform_2, window_bounds = array<i64: 1, 256>}, {pipeline_mode = #tpu.pipeline_mode<synchronous>, transform_indices = @transform_3, window_bounds = array<i64: 8, 256>}, {transform_indices = @transform_4, window_bounds = array<i64: 2, 8>}]} {
    %c0 = arith.constant 0 : index
    %c0_0 = arith.constant 0 : index
    %0 = vector.load %arg3[%c0, %c0_0] : memref<1x256xi32, #tpu.memory_space<vmem>>, vector<1x256xi32>
    %c0_1 = arith.constant 0 : index
    %c0_2 = arith.constant 0 : index
    %1 = vector.load %arg2[%c0_1, %c0_2] : memref<8x256xf32, #tpu.memory_space<vmem>>, vector<8x256xf32>
    %c0_3 = arith.constant 0 : index
    %c0_4 = arith.constant 0 : index
    %2 = vector.load %arg1[%c0_3, %c0_4] : memref<8x1xf32, #tpu.memory_space<vmem>>, vector<8x1xf32>
    %cst = arith.constant 0.0204081628 : f32
    %3 = vector.broadcast %cst : f32 to vector<8x1xf32>
    %4 = arith.mulf %2, %3 : vector<8x1xf32>
    %5 = vector.broadcast %4 : vector<8x1xf32> to vector<8x256xf32>
    %6 = arith.mulf %1, %5 : vector<8x256xf32>
    %c1_i32 = arith.constant 1 : i32
    %7 = tpu.dynamic_rotate %0 by %c1_i32 dim 1 : vector<1x256xi32>, i32 -> vector<1x256xi32>
    %8 = arith.cmpi eq, %7, %0 : vector<1x256xi32>
    %9 = arith.extui %8 : vector<1x256xi1> to vector<1x256xi32>
    %10 = arith.sitofp %9 : vector<1x256xi32> to vector<1x256xf32>
    %c255_i32 = arith.constant 255 : i32
    %11 = tpu.dynamic_rotate %0 by %c255_i32 dim 1 : vector<1x256xi32>, i32 -> vector<1x256xi32>
    %12 = arith.cmpi eq, %11, %0 : vector<1x256xi32>
    %13 = arith.extui %12 : vector<1x256xi1> to vector<1x256xi32>
    %14 = arith.sitofp %13 : vector<1x256xi32> to vector<1x256xf32>
    %c2_i32 = arith.constant 2 : i32
    %15 = tpu.dynamic_rotate %0 by %c2_i32 dim 1 : vector<1x256xi32>, i32 -> vector<1x256xi32>
    %16 = arith.cmpi eq, %15, %0 : vector<1x256xi32>
    %17 = arith.extui %16 : vector<1x256xi1> to vector<1x256xi32>
    %18 = arith.sitofp %17 : vector<1x256xi32> to vector<1x256xf32>
    %c254_i32 = arith.constant 254 : i32
    %19 = tpu.dynamic_rotate %0 by %c254_i32 dim 1 : vector<1x256xi32>, i32 -> vector<1x256xi32>
    %20 = arith.cmpi eq, %19, %0 : vector<1x256xi32>
    %21 = arith.extui %20 : vector<1x256xi1> to vector<1x256xi32>
    %22 = arith.sitofp %21 : vector<1x256xi32> to vector<1x256xf32>
    %c3_i32 = arith.constant 3 : i32
    %23 = tpu.dynamic_rotate %0 by %c3_i32 dim 1 : vector<1x256xi32>, i32 -> vector<1x256xi32>
    %24 = arith.cmpi eq, %23, %0 : vector<1x256xi32>
    %25 = arith.extui %24 : vector<1x256xi1> to vector<1x256xi32>
    %26 = arith.sitofp %25 : vector<1x256xi32> to vector<1x256xf32>
    %c253_i32 = arith.constant 253 : i32
    %27 = tpu.dynamic_rotate %0 by %c253_i32 dim 1 : vector<1x256xi32>, i32 -> vector<1x256xi32>
    %28 = arith.cmpi eq, %27, %0 : vector<1x256xi32>
    %29 = arith.extui %28 : vector<1x256xi1> to vector<1x256xi32>
    %30 = arith.sitofp %29 : vector<1x256xi32> to vector<1x256xf32>
    %c16_i32 = arith.constant 16 : i32
    %31 = tpu.dynamic_rotate %0 by %c16_i32 dim 1 : vector<1x256xi32>, i32 -> vector<1x256xi32>
    %32 = arith.subi %31, %0 : vector<1x256xi32>
    %c1_i32_5 = arith.constant 1 : i32
    %33 = vector.broadcast %c1_i32_5 : i32 to vector<1x256xi32>
    %34 = arith.cmpi eq, %32, %33 : vector<1x256xi32>
    %c-1_i32 = arith.constant -1 : i32
    %35 = vector.broadcast %c-1_i32 : i32 to vector<1x256xi32>
    %36 = arith.cmpi eq, %32, %35 : vector<1x256xi32>
    %37 = arith.ori %34, %36 : vector<1x256xi1>
    %38 = arith.extui %37 : vector<1x256xi1> to vector<1x256xi32>
    %39 = arith.sitofp %38 : vector<1x256xi32> to vector<1x256xf32>
    %c240_i32 = arith.constant 240 : i32
    %40 = tpu.dynamic_rotate %0 by %c240_i32 dim 1 : vector<1x256xi32>, i32 -> vector<1x256xi32>
    %41 = arith.subi %40, %0 : vector<1x256xi32>
    %c1_i32_6 = arith.constant 1 : i32
    %42 = vector.broadcast %c1_i32_6 : i32 to vector<1x256xi32>
    %43 = arith.cmpi eq, %41, %42 : vector<1x256xi32>
    %c-1_i32_7 = arith.constant -1 : i32
    %44 = vector.broadcast %c-1_i32_7 : i32 to vector<1x256xi32>
    %45 = arith.cmpi eq, %41, %44 : vector<1x256xi32>
    %46 = arith.ori %43, %45 : vector<1x256xi1>
    %47 = arith.extui %46 : vector<1x256xi1> to vector<1x256xi32>
    %48 = arith.sitofp %47 : vector<1x256xi32> to vector<1x256xf32>
    %c32_i32 = arith.constant 32 : i32
    %49 = tpu.dynamic_rotate %0 by %c32_i32 dim 1 : vector<1x256xi32>, i32 -> vector<1x256xi32>
    %50 = arith.subi %49, %0 : vector<1x256xi32>
    %c2_i32_8 = arith.constant 2 : i32
    %51 = vector.broadcast %c2_i32_8 : i32 to vector<1x256xi32>
    %52 = arith.cmpi eq, %50, %51 : vector<1x256xi32>
    %c-2_i32 = arith.constant -2 : i32
    %53 = vector.broadcast %c-2_i32 : i32 to vector<1x256xi32>
    %54 = arith.cmpi eq, %50, %53 : vector<1x256xi32>
    %55 = arith.ori %52, %54 : vector<1x256xi1>
    %56 = arith.extui %55 : vector<1x256xi1> to vector<1x256xi32>
    %57 = arith.sitofp %56 : vector<1x256xi32> to vector<1x256xf32>
    %c224_i32 = arith.constant 224 : i32
    %58 = tpu.dynamic_rotate %0 by %c224_i32 dim 1 : vector<1x256xi32>, i32 -> vector<1x256xi32>
    %59 = arith.subi %58, %0 : vector<1x256xi32>
    %c2_i32_9 = arith.constant 2 : i32
    %60 = vector.broadcast %c2_i32_9 : i32 to vector<1x256xi32>
    %61 = arith.cmpi eq, %59, %60 : vector<1x256xi32>
    %c-2_i32_10 = arith.constant -2 : i32
    %62 = vector.broadcast %c-2_i32_10 : i32 to vector<1x256xi32>
    %63 = arith.cmpi eq, %59, %62 : vector<1x256xi32>
    %64 = arith.ori %61, %63 : vector<1x256xi1>
    %65 = arith.extui %64 : vector<1x256xi1> to vector<1x256xi32>
    %66 = arith.sitofp %65 : vector<1x256xi32> to vector<1x256xf32>
    %c48_i32 = arith.constant 48 : i32
    %67 = tpu.dynamic_rotate %0 by %c48_i32 dim 1 : vector<1x256xi32>, i32 -> vector<1x256xi32>
    %68 = arith.subi %67, %0 : vector<1x256xi32>
    %c3_i32_11 = arith.constant 3 : i32
    %69 = vector.broadcast %c3_i32_11 : i32 to vector<1x256xi32>
    %70 = arith.cmpi eq, %68, %69 : vector<1x256xi32>
    %c-3_i32 = arith.constant -3 : i32
    %71 = vector.broadcast %c-3_i32 : i32 to vector<1x256xi32>
    %72 = arith.cmpi eq, %68, %71 : vector<1x256xi32>
    %73 = arith.ori %70, %72 : vector<1x256xi1>
    %74 = arith.extui %73 : vector<1x256xi1> to vector<1x256xi32>
    %75 = arith.sitofp %74 : vector<1x256xi32> to vector<1x256xf32>
    %c208_i32 = arith.constant 208 : i32
    %76 = tpu.dynamic_rotate %0 by %c208_i32 dim 1 : vector<1x256xi32>, i32 -> vector<1x256xi32>
    %77 = arith.subi %76, %0 : vector<1x256xi32>
    %c3_i32_12 = arith.constant 3 : i32
    %78 = vector.broadcast %c3_i32_12 : i32 to vector<1x256xi32>
    %79 = arith.cmpi eq, %77, %78 : vector<1x256xi32>
    %c-3_i32_13 = arith.constant -3 : i32
    %80 = vector.broadcast %c-3_i32_13 : i32 to vector<1x256xi32>
    %81 = arith.cmpi eq, %77, %80 : vector<1x256xi32>
    %82 = arith.ori %79, %81 : vector<1x256xi1>
    %83 = arith.extui %82 : vector<1x256xi1> to vector<1x256xi32>
    %84 = arith.sitofp %83 : vector<1x256xi32> to vector<1x256xf32>
    %c1_i32_14 = arith.constant 1 : i32
    %85 = tpu.dynamic_rotate %6 by %c1_i32_14 dim 1 : vector<8x256xf32>, i32 -> vector<8x256xf32>
    %86 = vector.broadcast %10 : vector<1x256xf32> to vector<8x256xf32>
    %87 = arith.mulf %85, %86 : vector<8x256xf32>
    %88 = arith.addf %6, %87 : vector<8x256xf32>
    %c255_i32_15 = arith.constant 255 : i32
    %89 = tpu.dynamic_rotate %6 by %c255_i32_15 dim 1 : vector<8x256xf32>, i32 -> vector<8x256xf32>
    %90 = vector.broadcast %14 : vector<1x256xf32> to vector<8x256xf32>
    %91 = arith.mulf %89, %90 : vector<8x256xf32>
    %92 = arith.addf %88, %91 : vector<8x256xf32>
    %c2_i32_16 = arith.constant 2 : i32
    %93 = tpu.dynamic_rotate %6 by %c2_i32_16 dim 1 : vector<8x256xf32>, i32 -> vector<8x256xf32>
    %94 = vector.broadcast %18 : vector<1x256xf32> to vector<8x256xf32>
    %95 = arith.mulf %93, %94 : vector<8x256xf32>
    %96 = arith.addf %92, %95 : vector<8x256xf32>
    %c254_i32_17 = arith.constant 254 : i32
    %97 = tpu.dynamic_rotate %6 by %c254_i32_17 dim 1 : vector<8x256xf32>, i32 -> vector<8x256xf32>
    %98 = vector.broadcast %22 : vector<1x256xf32> to vector<8x256xf32>
    %99 = arith.mulf %97, %98 : vector<8x256xf32>
    %100 = arith.addf %96, %99 : vector<8x256xf32>
    %c3_i32_18 = arith.constant 3 : i32
    %101 = tpu.dynamic_rotate %6 by %c3_i32_18 dim 1 : vector<8x256xf32>, i32 -> vector<8x256xf32>
    %102 = vector.broadcast %26 : vector<1x256xf32> to vector<8x256xf32>
    %103 = arith.mulf %101, %102 : vector<8x256xf32>
    %104 = arith.addf %100, %103 : vector<8x256xf32>
    %c253_i32_19 = arith.constant 253 : i32
    %105 = tpu.dynamic_rotate %6 by %c253_i32_19 dim 1 : vector<8x256xf32>, i32 -> vector<8x256xf32>
    %106 = vector.broadcast %30 : vector<1x256xf32> to vector<8x256xf32>
    %107 = arith.mulf %105, %106 : vector<8x256xf32>
    %108 = arith.addf %104, %107 : vector<8x256xf32>
    %c16_i32_20 = arith.constant 16 : i32
    %109 = tpu.dynamic_rotate %108 by %c16_i32_20 dim 1 : vector<8x256xf32>, i32 -> vector<8x256xf32>
    %110 = vector.broadcast %39 : vector<1x256xf32> to vector<8x256xf32>
    %111 = arith.mulf %109, %110 : vector<8x256xf32>
    %112 = arith.addf %108, %111 : vector<8x256xf32>
    %c240_i32_21 = arith.constant 240 : i32
    %113 = tpu.dynamic_rotate %108 by %c240_i32_21 dim 1 : vector<8x256xf32>, i32 -> vector<8x256xf32>
    %114 = vector.broadcast %48 : vector<1x256xf32> to vector<8x256xf32>
    %115 = arith.mulf %113, %114 : vector<8x256xf32>
    %116 = arith.addf %112, %115 : vector<8x256xf32>
    %c32_i32_22 = arith.constant 32 : i32
    %117 = tpu.dynamic_rotate %108 by %c32_i32_22 dim 1 : vector<8x256xf32>, i32 -> vector<8x256xf32>
    %118 = vector.broadcast %57 : vector<1x256xf32> to vector<8x256xf32>
    %119 = arith.mulf %117, %118 : vector<8x256xf32>
    %120 = arith.addf %116, %119 : vector<8x256xf32>
    %c224_i32_23 = arith.constant 224 : i32
    %121 = tpu.dynamic_rotate %108 by %c224_i32_23 dim 1 : vector<8x256xf32>, i32 -> vector<8x256xf32>
    %122 = vector.broadcast %66 : vector<1x256xf32> to vector<8x256xf32>
    %123 = arith.mulf %121, %122 : vector<8x256xf32>
    %124 = arith.addf %120, %123 : vector<8x256xf32>
    %c48_i32_24 = arith.constant 48 : i32
    %125 = tpu.dynamic_rotate %108 by %c48_i32_24 dim 1 : vector<8x256xf32>, i32 -> vector<8x256xf32>
    %126 = vector.broadcast %75 : vector<1x256xf32> to vector<8x256xf32>
    %127 = arith.mulf %125, %126 : vector<8x256xf32>
    %128 = arith.addf %124, %127 : vector<8x256xf32>
    %c208_i32_25 = arith.constant 208 : i32
    %129 = tpu.dynamic_rotate %108 by %c208_i32_25 dim 1 : vector<8x256xf32>, i32 -> vector<8x256xf32>
    %130 = vector.broadcast %84 : vector<1x256xf32> to vector<8x256xf32>
    %131 = arith.mulf %129, %130 : vector<8x256xf32>
    %132 = arith.addf %128, %131 : vector<8x256xf32>
    %cst_26 = arith.constant dense<0xFF800000> : vector<8xf32>
    %133 = vector.multi_reduction <maximumf>, %132, %cst_26 [1] : vector<8x256xf32> to vector<8xf32>
    %134 = vector.shape_cast %133 : vector<8xf32> to vector<8x1xf32>
    %135 = vector.broadcast %134 : vector<8x1xf32> to vector<8x256xf32>
    %136 = arith.subf %132, %135 : vector<8x256xf32>
    %137 = math.exp %136 : vector<8x256xf32>
    %c0_27 = arith.constant 0 : index
    %c0_28 = arith.constant 0 : index
    %138 = vector.load %arg4[%c0_27, %c0_28] : memref<8x256xf32, #tpu.memory_space<vmem>>, vector<8x256xf32>
    %cst_29 = arith.constant dense<0.000000e+00> : vector<8x8xf32>
    %139 = tpu.matmul %138, %137, %cst_29 {dimension_numbers = #tpu.dot_dimension_numbers<[1], [1], [0], [0], [0, 0, 1, 0], [], []>} : vector<8x256xf32>, vector<8x256xf32>, vector<8x8xf32> -> vector<8x8xf32>
    %140 = vector.extract_strided_slice %139 {offsets = [2, 0], sizes = [1, 8], strides = [1, 1]} : vector<8x8xf32> to vector<1x8xf32>
    %cst_30 = arith.constant 9.99999993E-9 : f32
    %141 = vector.broadcast %cst_30 : f32 to vector<1x8xf32>
    %142 = arith.addf %140, %141 : vector<1x8xf32>
    %143 = tpu.reciprocal %142 : vector<1x8xf32> -> vector<1x8xf32>
    %144 = vector.extract_strided_slice %139 {offsets = [0, 0], sizes = [2, 8], strides = [1, 1]} : vector<8x8xf32> to vector<2x8xf32>
    %145 = vector.broadcast %143 : vector<1x8xf32> to vector<2x8xf32>
    %146 = arith.mulf %144, %145 : vector<2x8xf32>
    %c0_31 = arith.constant 0 : index
    %c0_32 = arith.constant 0 : index
    %147 = vector.load %arg5[%c0_31, %c0_32] : memref<2x8xf32, #tpu.memory_space<vmem>>, vector<2x8xf32>
    tpu.vector_store %arg5[%c0_31, %c0_32], %146 {strides = array<i32>} : memref<2x8xf32, #tpu.memory_space<vmem>>, vector<2x8xf32>,
    return
  }
  func.func @transform_0(%arg0: i32) -> (i32, i32) {
    %c0_i32 = arith.constant 0 : i32
    %c0_i32_0 = arith.constant 0 : i32
    return %arg0, %c0_i32 : i32, i32
  }
  func.func @transform_1(%arg0: i32) -> (i32, i32) {
    %c0_i32 = arith.constant 0 : i32
    %c0_i32_0 = arith.constant 0 : i32
    return %arg0, %c0_i32 : i32, i32
  }
  func.func @transform_2(%arg0: i32) -> (i32, i32) {
    %c0_i32 = arith.constant 0 : i32
    %c0_i32_0 = arith.constant 0 : i32
    %c0_i32_1 = arith.constant 0 : i32
    return %c0_i32, %c0_i32_0 : i32, i32
  }
  func.func @transform_3(%arg0: i32) -> (i32, i32) {
    %c0_i32 = arith.constant 0 : i32
    %c0_i32_0 = arith.constant 0 : i32
    %c0_i32_1 = arith.constant 0 : i32
    return %c0_i32, %c0_i32_0 : i32, i32
  }
  func.func @transform_4(%arg0: i32) -> (i32, i32) {
    %c0_i32 = arith.constant 0 : i32
    %c0_i32_0 = arith.constant 0 : i32
    return %c0_i32, %arg0 : i32, i32
  }
}

</mosaic_0001>

<llo_original>
// kernel: tpu_custom_call.1
$region0: #{tpu_custom_call.1}
  #allocation0 [shape = 'u32[]', space=smem, size = 0x4, offset = 0x4, fixed_abs, tag = 'smem constant byte address 0x4 - core index']
  #allocation1 [shape = 'u32[144,128]{1,0:T(1,128)}', space=vmem, size = 0x12000, scoped, tag = 'internal scratch']
  %s0 = inlined_call_operand.vmem [shape: f32[8,1], index: 0, kind: input, shape index: {}]
  %s1 = inlined_call_operand.hbm [shape: f32[8,256], index: 1, kind: input, shape index: {}]
  %s2 = inlined_call_operand.vmem [shape: s32[1,256], index: 2, kind: input, shape index: {}]
  %s3 = inlined_call_operand.hbm [shape: f32[8,256], index: 3, kind: input, shape index: {}]
  %s4 = inlined_call_operand.hbm [shape: f32[2,8], index: 4, kind: output, shape index: {}]
  %s5 = sld [smem:[#allocation0]]
  $region34: #{tpu_custom_call.1} parent=0
    _
  %s7 = ssub.s32 1, %s5
  %s8 = scalar_select 0, %s7, %s5
  $region1: #{tpu_custom_call.1} parent=0
    #allocation2 [shape = 'u8[8192]{0}', space=vmem, size = 0x2000, scoped, tag = 'input window, operand 1, single buffered']
    #allocation3 [shape = 's32[1]{0}', space=sflag, size = 0x4, scoped, tag = 'scoped memory for tpu_custom_call.1']
    #allocation4 [shape = 's32[1]{0}', space=sflag, size = 0x4, scoped, tag = 'scoped memory for tpu_custom_call.1']
    #allocation5 [shape = 'u8[8192]{0}', space=vmem, size = 0x2000, scoped, tag = 'input window, operand 3, single buffered']
    #allocation6 [shape = 's32[1]{0}', space=sflag, size = 0x4, scoped, tag = 'scoped memory for tpu_custom_call.1']
    #allocation7 [shape = 'u8[1024]{0}', space=vmem, size = 0x400, scoped, tag = 'output window, operand 0, single buffered']
    %9 = vsyncpa [#allocation3], 0
    %10 = vsyncpa [#allocation6], 0
    %11 = vsyncpa [#allocation4], 0
    // Predicated region
    $region2: #{tpu_custom_call.1} parent=1 // pred_check
      _
    $region3: #{tpu_custom_call.1} parent=1 // pred_check_branch
      %13 = sbr.rel (0) target = $region5
    $region4: #{tpu_custom_call.1} parent=1 // pred_region
      _
    $region5: #{tpu_custom_call.1} parent=1 // pred_fallthru
      _
    // Predicated region
    $region6: #{tpu_custom_call.1} parent=1 // pred_check
      _
    $region7: #{tpu_custom_call.1} parent=1 // pred_check_branch
      %15 = sbr.rel (0) target = $region9
    $region8: #{tpu_custom_call.1} parent=1 // pred_region
      %s17 = ssub.s32 256, 256
      %18 = vsyncadd [#allocation3], %s17
      %s20 = sshll.u32 [#allocation2], 4
      %s21 = int_to_ptr.vmem [resolvable:$true] %s20
      %23 = dma.hbm_to_vmem [thread:$0]  %s1, 256, %s21, [#allocation3]
    $region9: #{tpu_custom_call.1} parent=1 // pred_fallthru
      _
    // Predicated region
    $region10: #{tpu_custom_call.1} parent=1 // pred_check
      _
    $region11: #{tpu_custom_call.1} parent=1 // pred_check_branch
      %25 = sbr.rel (0) target = $region13
    $region12: #{tpu_custom_call.1} parent=1 // pred_region
      _
    $region13: #{tpu_custom_call.1} parent=1 // pred_fallthru
      _
    // Predicated region
    $region14: #{tpu_custom_call.1} parent=1 // pred_check
      _
    $region15: #{tpu_custom_call.1} parent=1 // pred_check_branch
      %27 = sbr.rel (0) target = $region17
    $region16: #{tpu_custom_call.1} parent=1 // pred_region
      %s29 = ssub.s32 256, 256
      %30 = vsyncadd [#allocation6], %s29
      %s32 = sshll.u32 [#allocation5], 4
      %s33 = int_to_ptr.vmem [resolvable:$true] %s32
      %35 = dma.hbm_to_vmem [thread:$0]  %s3, 256, %s33, [#allocation6]
    $region17: #{tpu_custom_call.1} parent=1 // pred_fallthru
      _
    // Predicated region
    $region18: #{tpu_custom_call.1} parent=1 // pred_check
      _
    $region19: #{tpu_custom_call.1} parent=1 // pred_check_branch
      %37 = sbr.rel (0) target = $region21
    $region20: #{tpu_custom_call.1} parent=1 // pred_region
      %38 = dma.done [#allocation3], 256
    $region21: #{tpu_custom_call.1} parent=1 // pred_fallthru
      _
    // Predicated region
    $region22: #{tpu_custom_call.1} parent=1 // pred_check
      _
    $region23: #{tpu_custom_call.1} parent=1 // pred_check_branch
      %40 = sbr.rel (0) target = $region25
    $region24: #{tpu_custom_call.1} parent=1 // pred_region
      %41 = dma.done [#allocation6], 256
    $region25: #{tpu_custom_call.1} parent=1 // pred_fallthru
      _
    %v42 = vld [vmem:[%s2] sm:$0x3]
    %v43 = vld [vmem:[#allocation2] sm:$0xff]
    %v44 = vld [vmem:[#allocation2 + $0x8] sm:$0xff]
    %v45 = vld [vmem:[%s0] sm:$0xff]
    %v46 = vmul.f32 %v45, 0.020408163
    %48 = vset.pattern.permute.xlu0 0
    %49 = vperm.xlu0 %48, %v46
    %v50 = vpop.permute.xlu0 %49
    %v52 = vmul.f32 %v43, %v50
    %v53 = vmul.f32 %v44, %v50
    %v54 = vlaneseq
    %v55 = vshrl.u32 %v54, 7
    %v56 = vsub.s32 0, %v55
    %v57 = vrot.slane %v42, %v56
    %v58 = vlaneseq
    %v59 = vshrl.u32 %v58, 7
    %v60 = vsub.s32 1, %v59
    %v61 = vrot.slane %v42, %v60
    %62 = vrot.lane.b32.xlu0 %v57, 1
    %v63 = vpop.permute.xlu0 %62
    %64 = vrot.lane.b32.xlu0 %v61, 1
    %v65 = vpop.permute.xlu0 %64
    %v66 = vlaneseq
    %v67 = vand.u32 %v66, 127
    %vm68 = vcmp.lt.s32.totalorder %v67, 1
    %v69 = vsel %vm68, %v63, %v65
    %v70 = vsel %vm68, %v65, %v63
    %vm71 = vcmp.eq.s32.totalorder %v70, %v57
    %vm72 = vcmp.eq.s32.totalorder %v69, %v61
    %v73 = vsel %vm71, 1, 0
    %v74 = vsel %vm72, 1, 0
    %v75 = vcvt.s32.f32 %v73
    %v76 = vcvt.s32.f32 %v74
    %77 = vrot.lane.b32.xlu0 %v57, 127
    %v78 = vpop.permute.xlu0 %77
    %79 = vrot.lane.b32.xlu0 %v61, 127
    %v80 = vpop.permute.xlu0 %79
    %vm81 = vcmp.lt.s32.totalorder %v67, 127
    %v82 = vsel %vm81, %v78, %v80
    %v83 = vsel %vm81, %v80, %v78
    %vm84 = vcmp.eq.s32.totalorder %v82, %v57
    %vm85 = vcmp.eq.s32.totalorder %v83, %v61
    %v86 = vsel %vm84, 1, 0
    %v87 = vsel %vm85, 1, 0
    %v88 = vcvt.s32.f32 %v86
    %v89 = vcvt.s32.f32 %v87
    %90 = vrot.lane.b32.xlu0 %v57, 2
    %v91 = vpop.permute.xlu0 %90
    %92 = vrot.lane.b32.xlu0 %v61, 2
    %v93 = vpop.permute.xlu0 %92
    %vm94 = vcmp.lt.s32.totalorder %v67, 2
    %v95 = vsel %vm94, %v91, %v93
    %v96 = vsel %vm94, %v93, %v91
    %vm97 = vcmp.eq.s32.totalorder %v96, %v57
    %vm98 = vcmp.eq.s32.totalorder %v95, %v61
    %v99 = vsel %vm97, 1, 0
    %v100 = vsel %vm98, 1, 0
    %v101 = vcvt.s32.f32 %v99
    %v102 = vcvt.s32.f32 %v100
    %103 = vrot.lane.b32.xlu0 %v57, 126
    %v104 = vpop.permute.xlu0 %103
    %105 = vrot.lane.b32.xlu0 %v61, 126
    %v106 = vpop.permute.xlu0 %105
    %vm107 = vcmp.lt.s32.totalorder %v67, 126
    %v108 = vsel %vm107, %v104, %v106
    %v109 = vsel %vm107, %v106, %v104
    %vm110 = vcmp.eq.s32.totalorder %v108, %v57
    %vm111 = vcmp.eq.s32.totalorder %v109, %v61
    %v112 = vsel %vm110, 1, 0
    %v113 = vsel %vm111, 1, 0
    %v114 = vcvt.s32.f32 %v112
    %v115 = vcvt.s32.f32 %v113
    %116 = vrot.lane.b32.xlu0 %v57, 3
    %v117 = vpop.permute.xlu0 %116
    %118 = vrot.lane.b32.xlu0 %v61, 3
    %v119 = vpop.permute.xlu0 %118
    %vm120 = vcmp.lt.s32.totalorder %v67, 3
    %v121 = vsel %vm120, %v117, %v119
    %v122 = vsel %vm120, %v119, %v117
    %vm123 = vcmp.eq.s32.totalorder %v122, %v57
    %vm124 = vcmp.eq.s32.totalorder %v121, %v61
    %v125 = vsel %vm123, 1, 0
    %v126 = vsel %vm124, 1, 0
    %v127 = vcvt.s32.f32 %v125
    %v128 = vcvt.s32.f32 %v126
    %129 = vrot.lane.b32.xlu0 %v57, 125
    %v130 = vpop.permute.xlu0 %129
    %131 = vrot.lane.b32.xlu0 %v61, 125
    %v132 = vpop.permute.xlu0 %131
    %vm133 = vcmp.lt.s32.totalorder %v67, 125
    %v134 = vsel %vm133, %v130, %v132
    %v135 = vsel %vm133, %v132, %v130
    %vm136 = vcmp.eq.s32.totalorder %v134, %v57
    %vm137 = vcmp.eq.s32.totalorder %v135, %v61
    %v138 = vsel %vm136, 1, 0
    %v139 = vsel %vm137, 1, 0
    %v140 = vcvt.s32.f32 %v138
    %v141 = vcvt.s32.f32 %v139
    %142 = vrot.lane.b32.xlu0 %v57, 16
    %v143 = vpop.permute.xlu0 %142
    %144 = vrot.lane.b32.xlu0 %v61, 16
    %v145 = vpop.permute.xlu0 %144
    %vm146 = vcmp.lt.s32.totalorder %v67, 16
    %v147 = vsel %vm146, %v143, %v145
    %v148 = vsel %vm146, %v145, %v143
    %v149 = vsub.s32 %v148, %v57
    %v150 = vsub.s32 %v147, %v61
    %vm151 = vcmp.eq.s32.totalorder %v149, 1
    %vm152 = vcmp.eq.s32.totalorder %v150, 1
    %vm153 = vcmp.eq.s32.totalorder %v149, 4294967295
    %vm154 = vcmp.eq.s32.totalorder %v150, 4294967295
    %vm155 = vmor %vm151, %vm153
    %vm156 = vmor %vm152, %vm154
    %v157 = vsel %vm155, 1, 0
    %v158 = vsel %vm156, 1, 0
    %v159 = vcvt.s32.f32 %v157
    %v160 = vcvt.s32.f32 %v158
    %161 = vrot.lane.b32.xlu0 %v57, 112
    %v162 = vpop.permute.xlu0 %161
    %163 = vrot.lane.b32.xlu0 %v61, 112
    %v164 = vpop.permute.xlu0 %163
    %vm165 = vcmp.lt.s32.totalorder %v67, 112
    %v166 = vsel %vm165, %v162, %v164
    %v167 = vsel %vm165, %v164, %v162
    %v168 = vsub.s32 %v166, %v57
    %v169 = vsub.s32 %v167, %v61
    %vm170 = vcmp.eq.s32.totalorder %v168, 1
    %vm171 = vcmp.eq.s32.totalorder %v169, 1
    %vm172 = vcmp.eq.s32.totalorder %v168, 4294967295
    %vm173 = vcmp.eq.s32.totalorder %v169, 4294967295
    %vm174 = vmor %vm170, %vm172
    %vm175 = vmor %vm171, %vm173
    %v176 = vsel %vm174, 1, 0
    %v177 = vsel %vm175, 1, 0
    %v178 = vcvt.s32.f32 %v176
    %v179 = vcvt.s32.f32 %v177
    %180 = vrot.lane.b32.xlu0 %v57, 32
    %v181 = vpop.permute.xlu0 %180
    %182 = vrot.lane.b32.xlu0 %v61, 32
    %v183 = vpop.permute.xlu0 %182
    %vm184 = vcmp.lt.s32.totalorder %v67, 32
    %v185 = vsel %vm184, %v181, %v183
    %v186 = vsel %vm184, %v183, %v181
    %v187 = vsub.s32 %v186, %v57
    %v188 = vsub.s32 %v185, %v61
    %vm189 = vcmp.eq.s32.totalorder %v187, 2
    %vm190 = vcmp.eq.s32.totalorder %v188, 2
    %vm191 = vcmp.eq.s32.totalorder %v187, 4294967294
    %vm192 = vcmp.eq.s32.totalorder %v188, 4294967294
    %vm193 = vmor %vm189, %vm191
    %vm194 = vmor %vm190, %vm192
    %v195 = vsel %vm193, 1, 0
    %v196 = vsel %vm194, 1, 0
    %v197 = vcvt.s32.f32 %v195
    %v198 = vcvt.s32.f32 %v196
    %199 = vrot.lane.b32.xlu0 %v57, 96
    %v200 = vpop.permute.xlu0 %199
    %201 = vrot.lane.b32.xlu0 %v61, 96
    %v202 = vpop.permute.xlu0 %201
    %vm203 = vcmp.lt.s32.totalorder %v67, 96
    %v204 = vsel %vm203, %v200, %v202
    %v205 = vsel %vm203, %v202, %v200
    %v206 = vsub.s32 %v204, %v57
    %v207 = vsub.s32 %v205, %v61
    %vm208 = vcmp.eq.s32.totalorder %v206, 2
    %vm209 = vcmp.eq.s32.totalorder %v207, 2
    %vm210 = vcmp.eq.s32.totalorder %v206, 4294967294
    %vm211 = vcmp.eq.s32.totalorder %v207, 4294967294
    %vm212 = vmor %vm208, %vm210
    %vm213 = vmor %vm209, %vm211
    %v214 = vsel %vm212, 1, 0
    %v215 = vsel %vm213, 1, 0
    %v216 = vcvt.s32.f32 %v214
    %v217 = vcvt.s32.f32 %v215
    %218 = vrot.lane.b32.xlu0 %v57, 48
    %v219 = vpop.permute.xlu0 %218
    %220 = vrot.lane.b32.xlu0 %v61, 48
    %v221 = vpop.permute.xlu0 %220
    %vm222 = vcmp.lt.s32.totalorder %v67, 48
    %v223 = vsel %vm222, %v219, %v221
    %v224 = vsel %vm222, %v221, %v219
    %v225 = vsub.s32 %v224, %v57
    %v226 = vsub.s32 %v223, %v61
    %vm227 = vcmp.eq.s32.totalorder %v225, 3
    %vm228 = vcmp.eq.s32.totalorder %v226, 3
    %vm229 = vcmp.eq.s32.totalorder %v225, 4294967293
    %vm230 = vcmp.eq.s32.totalorder %v226, 4294967293
    %vm231 = vmor %vm227, %vm229
    %vm232 = vmor %vm228, %vm230
    %v233 = vsel %vm231, 1, 0
    %v234 = vsel %vm232, 1, 0
    %v235 = vcvt.s32.f32 %v233
    %v236 = vcvt.s32.f32 %v234
    %237 = vrot.lane.b32.xlu0 %v57, 80
    %v238 = vpop.permute.xlu0 %237
    %239 = vrot.lane.b32.xlu0 %v61, 80
    %v240 = vpop.permute.xlu0 %239
    %vm241 = vcmp.lt.s32.totalorder %v67, 80
    %v242 = vsel %vm241, %v238, %v240
    %v243 = vsel %vm241, %v240, %v238
    %v244 = vsub.s32 %v242, %v57
    %v245 = vsub.s32 %v243, %v61
    %vm246 = vcmp.eq.s32.totalorder %v244, 3
    %vm247 = vcmp.eq.s32.totalorder %v245, 3
    %vm248 = vcmp.eq.s32.totalorder %v244, 4294967293
    %vm249 = vcmp.eq.s32.totalorder %v245, 4294967293
    %vm250 = vmor %vm246, %vm248
    %vm251 = vmor %vm247, %vm249
    %v252 = vsel %vm250, 1, 0
    %v253 = vsel %vm251, 1, 0
    %v254 = vcvt.s32.f32 %v252
    %v255 = vcvt.s32.f32 %v253
    %256 = vrot.lane.b32.xlu0 %v52, 1
    %v257 = vpop.permute.xlu0 %256
    %258 = vrot.lane.b32.xlu0 %v53, 1
    %v259 = vpop.permute.xlu0 %258
    %v260 = vsel %vm68, %v257, %v259
    %v261 = vsel %vm68, %v259, %v257
    %v262 = vlaneseq
    %v263 = vshrl.u32 %v262, 7
    %v264 = vsub.s32 0, %v263
    %v265 = vrot.slane %v75, %v264
    %v266 = vlaneseq
    %v267 = vshrl.u32 %v266, 7
    %v268 = vsub.s32 0, %v267
    %v269 = vrot.slane %v76, %v268
    %v270 = vmul.f32 %v261, %v265
    %v271 = vmul.f32 %v260, %v269
    %v272 = vadd.f32 %v52, %v270
    %v273 = vadd.f32 %v53, %v271
    %274 = vrot.lane.b32.xlu0 %v52, 127
    %v275 = vpop.permute.xlu0 %274
    %276 = vrot.lane.b32.xlu0 %v53, 127
    %v277 = vpop.permute.xlu0 %276
    %v278 = vsel %vm81, %v275, %v277
    %v279 = vsel %vm81, %v277, %v275
    %v280 = vlaneseq
    %v281 = vshrl.u32 %v280, 7
    %v282 = vsub.s32 0, %v281
    %v283 = vrot.slane %v88, %v282
    %v284 = vlaneseq
    %v285 = vshrl.u32 %v284, 7
    %v286 = vsub.s32 0, %v285
    %v287 = vrot.slane %v89, %v286
    %v288 = vmul.f32 %v278, %v283
    %v289 = vmul.f32 %v279, %v287
    %v290 = vadd.f32 %v272, %v288
    %v291 = vadd.f32 %v273, %v289
    %292 = vrot.lane.b32.xlu0 %v52, 2
    %v293 = vpop.permute.xlu0 %292
    %294 = vrot.lane.b32.xlu0 %v53, 2
    %v295 = vpop.permute.xlu0 %294
    %v296 = vsel %vm94, %v293, %v295
    %v297 = vsel %vm94, %v295, %v293
    %v298 = vlaneseq
    %v299 = vshrl.u32 %v298, 7
    %v300 = vsub.s32 0, %v299
    %v301 = vrot.slane %v101, %v300
    %v302 = vlaneseq
    %v303 = vshrl.u32 %v302, 7
    %v304 = vsub.s32 0, %v303
    %v305 = vrot.slane %v102, %v304
    %v306 = vmul.f32 %v297, %v301
    %v307 = vmul.f32 %v296, %v305
    %v308 = vadd.f32 %v290, %v306
    %v309 = vadd.f32 %v291, %v307
    %310 = vrot.lane.b32.xlu0 %v52, 126
    %v311 = vpop.permute.xlu0 %310
    %312 = vrot.lane.b32.xlu0 %v53, 126
    %v313 = vpop.permute.xlu0 %312
    %v314 = vsel %vm107, %v311, %v313
    %v315 = vsel %vm107, %v313, %v311
    %v316 = vlaneseq
    %v317 = vshrl.u32 %v316, 7
    %v318 = vsub.s32 0, %v317
    %v319 = vrot.slane %v114, %v318
    %v320 = vlaneseq
    %v321 = vshrl.u32 %v320, 7
    %v322 = vsub.s32 0, %v321
    %v323 = vrot.slane %v115, %v322
    %v324 = vmul.f32 %v314, %v319
    %v325 = vmul.f32 %v315, %v323
    %v326 = vadd.f32 %v308, %v324
    %v327 = vadd.f32 %v309, %v325
    %328 = vrot.lane.b32.xlu0 %v52, 3
    %v329 = vpop.permute.xlu0 %328
    %330 = vrot.lane.b32.xlu0 %v53, 3
    %v331 = vpop.permute.xlu0 %330
    %v332 = vsel %vm120, %v329, %v331
    %v333 = vsel %vm120, %v331, %v329
    %v334 = vlaneseq
    %v335 = vshrl.u32 %v334, 7
    %v336 = vsub.s32 0, %v335
    %v337 = vrot.slane %v127, %v336
    %v338 = vlaneseq
    %v339 = vshrl.u32 %v338, 7
    %v340 = vsub.s32 0, %v339
    %v341 = vrot.slane %v128, %v340
    %v342 = vmul.f32 %v333, %v337
    %v343 = vmul.f32 %v332, %v341
    %v344 = vadd.f32 %v326, %v342
    %v345 = vadd.f32 %v327, %v343
    %346 = vrot.lane.b32.xlu0 %v52, 125
    %v347 = vpop.permute.xlu0 %346
    %348 = vrot.lane.b32.xlu0 %v53, 125
    %v349 = vpop.permute.xlu0 %348
    %v350 = vsel %vm133, %v347, %v349
    %v351 = vsel %vm133, %v349, %v347
    %v352 = vlaneseq
    %v353 = vshrl.u32 %v352, 7
    %v354 = vsub.s32 0, %v353
    %v355 = vrot.slane %v140, %v354
    %v356 = vlaneseq
    %v357 = vshrl.u32 %v356, 7
    %v358 = vsub.s32 0, %v357
    %v359 = vrot.slane %v141, %v358
    %v360 = vmul.f32 %v350, %v355
    %v361 = vmul.f32 %v351, %v359
    %v362 = vadd.f32 %v344, %v360
    %v363 = vadd.f32 %v345, %v361
    %364 = vrot.lane.b32.xlu0 %v362, 16
    %v365 = vpop.permute.xlu0 %364
    %366 = vrot.lane.b32.xlu0 %v363, 16
    %v367 = vpop.permute.xlu0 %366
    %v368 = vsel %vm146, %v365, %v367
    %v369 = vsel %vm146, %v367, %v365
    %v370 = vlaneseq
    %v371 = vshrl.u32 %v370, 7
    %v372 = vsub.s32 0, %v371
    %v373 = vrot.slane %v159, %v372
    %v374 = vlaneseq
    %v375 = vshrl.u32 %v374, 7
    %v376 = vsub.s32 0, %v375
    %v377 = vrot.slane %v160, %v376
    %v378 = vmul.f32 %v369, %v373
    %v379 = vmul.f32 %v368, %v377
    %v380 = vadd.f32 %v362, %v378
    %v381 = vadd.f32 %v363, %v379
    %382 = vrot.lane.b32.xlu0 %v362, 112
    %v383 = vpop.permute.xlu0 %382
    %384 = vrot.lane.b32.xlu0 %v363, 112
    %v385 = vpop.permute.xlu0 %384
    %v386 = vsel %vm165, %v383, %v385
    %v387 = vsel %vm165, %v385, %v383
    %v388 = vlaneseq
    %v389 = vshrl.u32 %v388, 7
    %v390 = vsub.s32 0, %v389
    %v391 = vrot.slane %v178, %v390
    %v392 = vlaneseq
    %v393 = vshrl.u32 %v392, 7
    %v394 = vsub.s32 0, %v393
    %v395 = vrot.slane %v179, %v394
    %v396 = vmul.f32 %v386, %v391
    %v397 = vmul.f32 %v387, %v395
    %v398 = vadd.f32 %v380, %v396
    %v399 = vadd.f32 %v381, %v397
    %400 = vrot.lane.b32.xlu0 %v362, 32
    %v401 = vpop.permute.xlu0 %400
    %402 = vrot.lane.b32.xlu0 %v363, 32
    %v403 = vpop.permute.xlu0 %402
    %v404 = vsel %vm184, %v401, %v403
    %v405 = vsel %vm184, %v403, %v401
    %v406 = vlaneseq
    %v407 = vshrl.u32 %v406, 7
    %v408 = vsub.s32 0, %v407
    %v409 = vrot.slane %v197, %v408
    %v410 = vlaneseq
    %v411 = vshrl.u32 %v410, 7
    %v412 = vsub.s32 0, %v411
    %v413 = vrot.slane %v198, %v412
    %v414 = vmul.f32 %v405, %v409
    %v415 = vmul.f32 %v404, %v413
    %v416 = vadd.f32 %v398, %v414
    %v417 = vadd.f32 %v399, %v415
    %418 = vrot.lane.b32.xlu0 %v362, 96
    %v419 = vpop.permute.xlu0 %418
    %420 = vrot.lane.b32.xlu0 %v363, 96
    %v421 = vpop.permute.xlu0 %420
    %v422 = vsel %vm203, %v419, %v421
    %v423 = vsel %vm203, %v421, %v419
    %v424 = vlaneseq
    %v425 = vshrl.u32 %v424, 7
    %v426 = vsub.s32 0, %v425
    %v427 = vrot.slane %v216, %v426
    %v428 = vlaneseq
    %v429 = vshrl.u32 %v428, 7
    %v430 = vsub.s32 0, %v429
    %v431 = vrot.slane %v217, %v430
    %v432 = vmul.f32 %v422, %v427
    %v433 = vmul.f32 %v423, %v431
    %v434 = vadd.f32 %v416, %v432
    %v435 = vadd.f32 %v417, %v433
    %436 = vrot.lane.b32.xlu0 %v362, 48
    %v437 = vpop.permute.xlu0 %436
    %438 = vrot.lane.b32.xlu0 %v363, 48
    %v439 = vpop.permute.xlu0 %438
    %v440 = vsel %vm222, %v437, %v439
    %v441 = vsel %vm222, %v439, %v437
    %v442 = vlaneseq
    %v443 = vshrl.u32 %v442, 7
    %v444 = vsub.s32 0, %v443
    %v445 = vrot.slane %v235, %v444
    %v446 = vlaneseq
    %v447 = vshrl.u32 %v446, 7
    %v448 = vsub.s32 0, %v447
    %v449 = vrot.slane %v236, %v448
    %v450 = vmul.f32 %v441, %v445
    %v451 = vmul.f32 %v440, %v449
    %v452 = vadd.f32 %v434, %v450
    %v453 = vadd.f32 %v435, %v451
    %454 = vrot.lane.b32.xlu0 %v362, 80
    %v455 = vpop.permute.xlu0 %454
    %456 = vrot.lane.b32.xlu0 %v363, 80
    %v457 = vpop.permute.xlu0 %456
    %v458 = vsel %vm241, %v455, %v457
    %v459 = vsel %vm241, %v457, %v455
    %v460 = vlaneseq
    %v461 = vshrl.u32 %v460, 7
    %v462 = vsub.s32 0, %v461
    %v463 = vrot.slane %v254, %v462
    %v464 = vlaneseq
    %v465 = vshrl.u32 %v464, 7
    %v466 = vsub.s32 0, %v465
    %v467 = vrot.slane %v255, %v466
    %v468 = vmul.f32 %v458, %v463
    %v469 = vmul.f32 %v459, %v467
    %v470 = vadd.f32 %v452, %v468
    %v471 = vadd.f32 %v453, %v469
    %v472 = vmax.f32 %v470, %v471
    %473 = vmax.xlane.f32.xlu0 %v472
    %v474 = vpop.xlane.xlu0 %473
    %v475 = vsub.f32 %v470, %v474
    %v476 = vsub.f32 %v471, %v474
    %v477 = vmul.f32 %v475, 1.442695
    %v478 = vpow.pop %v477
    %v479 = vmul.f32 %v476, 1.442695
    %v480 = vpow.pop %v479
    %v481 = vld [vmem:[#allocation5] sm:$0xff]
    %v482 = vld [vmem:[#allocation5 + $0x8] sm:$0xff]
    %483 = vmatprep.subr.mxu0 0.0
    %484 = vmatpush1.xpose.msra.mxu0 0.0
    %485 = vmatprep.subr.mxu0 0.0
    %486 = vmatpush1.xpose.msra.mxu0 0.0
    %487 = vmatprep.subr.mxu0 0.0
    %488 = vmatpush1.xpose.msra.mxu0 0.0
    %489 = vmatprep.subr.mxu0 0.0
    %490 = vmatpush1.xpose.msra.mxu0 0.0
    %491 = vmatprep.subr.mxu0 0.0
    %492 = vmatpush1.xpose.msra.mxu0 0.0
    %493 = vmatprep.subr.mxu0 0.0
    %494 = vmatpush1.xpose.msra.mxu0 0.0
    %495 = vmatprep.subr.mxu0 0.0
    %496 = vmatpush1.xpose.msra.mxu0 0.0
    %497 = vmatprep.subr.mxu0 0.0
    %498 = vmatpush1.xpose.msra.mxu0 0.0
    %499 = vmatprep.subr.mxu0 0.0
    %500 = vmatpush1.xpose.msra.mxu0 0.0
    %501 = vmatprep.subr.mxu0 0.0
    %502 = vmatpush1.xpose.msra.mxu0 0.0
    %503 = vmatprep.subr.mxu0 0.0
    %504 = vmatpush1.xpose.msra.mxu0 0.0
    %505 = vmatprep.subr.mxu0 0.0
    %506 = vmatpush1.xpose.msra.mxu0 0.0
    %507 = vmatprep.subr.mxu0 0.0
    %508 = vmatpush1.xpose.msra.mxu0 0.0
    %509 = vmatprep.subr.mxu0 0.0
    %510 = vmatpush1.xpose.msra.mxu0 0.0
    %511 = vmatprep.subr.mxu0 0.0
    %512 = vmatpush1.xpose.msra.mxu0 0.0
    %513 = vmatprep.subr.mxu0 %v480
    %514 = vmatpush1.xpose.msra.mxu0 %v478
    %515 = vmatprep.subr.mxu0 0.0
    %516 = vmatpush2.xpose.msra.mxu0 0.0
    %517 = vmatprep.subr.mxu0 0.0
    %518 = vmatpush2.xpose.msra.mxu0 0.0
    %519 = vmatprep.subr.mxu0 0.0
    %520 = vmatpush2.xpose.msra.mxu0 0.0
    %521 = vmatprep.subr.mxu0 0.0
    %522 = vmatpush2.xpose.msra.mxu0 0.0
    %523 = vmatprep.subr.mxu0 0.0
    %524 = vmatpush2.xpose.msra.mxu0 0.0
    %525 = vmatprep.subr.mxu0 0.0
    %526 = vmatpush2.xpose.msra.mxu0 0.0
    %527 = vmatprep.subr.mxu0 0.0
    %528 = vmatpush2.xpose.msra.mxu0 0.0
    %529 = vmatprep.subr.mxu0 0.0
    %530 = vmatpush2.xpose.msra.mxu0 0.0
    %531 = vmatprep.subr.mxu0 0.0
    %532 = vmatpush2.xpose.msra.mxu0 0.0
    %533 = vmatprep.subr.mxu0 0.0
    %534 = vmatpush2.xpose.msra.mxu0 0.0
    %535 = vmatprep.subr.mxu0 0.0
    %536 = vmatpush2.xpose.msra.mxu0 0.0
    %537 = vmatprep.subr.mxu0 0.0
    %538 = vmatpush2.xpose.msra.mxu0 0.0
    %539 = vmatprep.subr.mxu0 0.0
    %540 = vmatpush2.xpose.msra.mxu0 0.0
    %541 = vmatprep.subr.mxu0 0.0
    %542 = vmatpush2.xpose.msra.mxu0 0.0
    %543 = vmatprep.subr.mxu0 0.0
    %544 = vmatpush2.xpose.msra.mxu0 0.0
    %545 = vmatprep.subr.mxu0 0.0
    %546 = vmatpush2.xpose.msra.mxu0 0.0
    %547 = vmatprep.mubr.f32.mxu0 %v482
    %548 = vmatmul.mubr.f32.gmra.mxu0 %v481
    %v549 = vpop.f32.mrf.mxu0
    %v550 = vadd.f32 0.0, %v549
    %v551 = vpop.f32.mrf.mxu0
    %552 = vdwg.mxu0
    %v553 = vadd.f32 %v550, 1e-08
    %v554 = vrcp.pop %v553
    %v555 = vlaneseq
    %v556 = vshrl.u32 %v555, 7
    %v557 = vsub.s32 2, %v556
    %v558 = vrot.slane %v554, %v557
    %v559 = vmul.f32 %v550, %v558
    %vm560 = vcmask 58368
    %561 = vst.msk [vmem:[#allocation7] sm:$0x3] %vm560, %v559
    // Predicated region
    $region26: #{tpu_custom_call.1} parent=1 // pred_check
      _
    $region27: #{tpu_custom_call.1} parent=1 // pred_check_branch
      %563 = sbr.rel (0) target = $region29
    $region28: #{tpu_custom_call.1} parent=1 // pred_region
      %s565 = ssub.s32 32, 32
      %566 = vsyncadd [#allocation4], %s565
      %s568 = sshll.u32 [#allocation7], 4
      %s569 = int_to_ptr.vmem [resolvable:$true] %s568
      %571 = dma.vmem_to_hbm [thread:$0]  %s569, 32, %s4, [#allocation4]
    $region29: #{tpu_custom_call.1} parent=1 // pred_fallthru
      _
    // Predicated region
    $region30: #{tpu_custom_call.1} parent=1 // pred_check
      _
    $region31: #{tpu_custom_call.1} parent=1 // pred_check_branch
      %573 = sbr.rel (0) target = $region33
    $region32: #{tpu_custom_call.1} parent=1 // pred_region
      %574 = dma.done [#allocation4], 32
    $region33: #{tpu_custom_call.1} parent=1 // pred_fallthru
      _
    %575 = vsyncpa [#allocation3], 1
    %576 = vsyncpa [#allocation6], 1
    %577 = vsyncpa [#allocation4], 1

</llo_original>
